<compile_context>
chip_gen: v5e
topology: v5e:2x2
jax: 0.10.0
libtpu: 0.0.40
codegen_flags: <defaults>
</compile_context>

<pallas_src>
import math
from functools import partial

import jax
import jax.numpy as jnp
from jax.experimental import pallas as pl
from jax.experimental.pallas import tpu as pltpu


def _kv_compress_kernel(*refs, has_tail: bool, sc: int, compute_dtype):
    """One grid step = one (batch*head) row; compresses both K and V.

    Ref layout:
      has_tail: kg, vg, ktail, vtail, w1, w2, w3, b, ok, ov
      else    : kg, vg,               w1, w2, w3, b, ok, ov
    kg/vg : (1, Sc, Din)   grouped tokens of this (b, h) row
    ktail : (1, tail, D)   leftover (uncompressed) tokens
    w1    : (2, Din, D)  w2/w3 : (2, D, D)  b : (2, 3, D)   [0]=K params, [1]=V params
    ok/ov : (1, Sc + tail, D)
    """
    if has_tail:
        (kg_ref, vg_ref, ktail_ref, vtail_ref,
         w1_ref, w2_ref, w3_ref, b_ref, ok_ref, ov_ref) = refs
    else:
        kg_ref, vg_ref, w1_ref, w2_ref, w3_ref, b_ref, ok_ref, ov_ref = refs
        ktail_ref = vtail_ref = None

    def run(xg_ref, xtail_ref, o_ref, idx):
        x = xg_ref[0]                                    # (Sc, Din)
        w1 = w1_ref[idx].astype(compute_dtype)           # (Din, D)  resident across grid
        w2 = w2_ref[idx].astype(compute_dtype)           # (D, D)
        w3 = w3_ref[idx].astype(compute_dtype)           # (D, D)
        b = b_ref[idx]                                    # (3, D) f32
        # MXU in bf16, f32 accumulation; bias add + relu stay f32 (VPU has slack).
        h = jnp.dot(x.astype(compute_dtype), w1, preferred_element_type=jnp.float32)
        h = jnp.maximum(h + b[0:1, :], 0.0)
        h = jnp.dot(h.astype(compute_dtype), w2, preferred_element_type=jnp.float32)
        h = jnp.maximum(h + b[1:2, :], 0.0)
        h = jnp.dot(h.astype(compute_dtype), w3, preferred_element_type=jnp.float32)
        h = h + b[2:3, :]
        if has_tail:
            o_ref[0, :sc, :] = h.astype(o_ref.dtype)
            # Leftover tokens are copied inside the kernel -> no jnp.concatenate in HBM.
            o_ref[0, sc:, :] = xtail_ref[0].astype(o_ref.dtype)
        else:
            o_ref[0] = h.astype(o_ref.dtype)

    run(kg_ref, ktail_ref, ok_ref, 0)   # K
    run(vg_ref, vtail_ref, ov_ref, 1)   # V


def compress_kv_pair(k, v, W1, W2, W3, Bs, *, cf, compute_dtype=jnp.bfloat16):
    """Compress K and V (B, H, S, D) with one fused pallas_call.

    Returns (ck, cv) of shape (B, H, Sc + tail, D), Sc = S // cf, tail = S - Sc*cf.
    """
    B, H, S, D = k.shape
    Sc = S // cf
    compress_len = Sc * cf
    tail = S - compress_len
    Sout = Sc + tail
    BH = B * H
    Din = D * cf

    kf = k.reshape(BH, S, D)                      # free
    vf = v.reshape(BH, S, D)
    if tail == 0:
        kg = kf.reshape(BH, Sc, Din)              # contiguous -> free bitcast view
        vg = vf.reshape(BH, Sc, Din)
        extra = []
    else:
        kg = kf[:, :compress_len, :].reshape(BH, Sc, Din)   # see TODO(synk) above
        vg = vf[:, :compress_len, :].reshape(BH, Sc, Din)
        extra = [kf[:, compress_len:, :],          # tiny (< cf tokens per bh row)
                 vf[:, compress_len:, :]]

    bh_map = lambda i: (i, 0, 0)
    const_map = lambda i: (0, 0, 0)

    in_specs = [pl.BlockSpec((1, Sc, Din), bh_map),
                pl.BlockSpec((1, Sc, Din), bh_map)]
    if tail:
        in_specs += [pl.BlockSpec((1, tail, D), bh_map),
                     pl.BlockSpec((1, tail, D), bh_map)]
    in_specs += [pl.BlockSpec(W1.shape, const_map),    # weights stay VMEM-resident
                 pl.BlockSpec(W2.shape, const_map),
                 pl.BlockSpec(W3.shape, const_map),
                 pl.BlockSpec(Bs.shape, const_map)]

    out_specs = (pl.BlockSpec((1, Sout, D), bh_map),
                 pl.BlockSpec((1, Sout, D), bh_map))
    out_shape = (jax.ShapeDtypeStruct((BH, Sout, D), k.dtype),
                 jax.ShapeDtypeStruct((BH, Sout, D), v.dtype))

    itemsize = jnp.dtype(k.dtype).itemsize
    w_itemsize = jnp.dtype(W1.dtype).itemsize
    flops = 2 * 2 * BH * Sc * (Din * D + 2 * D * D)          # K and V, 2 flops per MAC
    bytes_accessed = ((2 * BH * Sc * Din + 2 * BH * tail * D + 2 * BH * Sout * D) * itemsize
                      + (W1.size + W2.size + W3.size + Bs.size) * w_itemsize)

    kernel = partial(_kv_compress_kernel, has_tail=bool(tail), sc=Sc,
                     compute_dtype=compute_dtype)

    ck, cv = pl.pallas_call(
        kernel,
        out_shape=out_shape,
        grid=(BH,),                                  # >= 2 steps whenever B*H >= 2
        in_specs=in_specs,
        out_specs=out_specs,
        compiler_params=pltpu.CompilerParams(
            dimension_semantics=("parallel",)),      # shard bh rows across TensorCores
        cost_estimate=pl.CostEstimate(flops=flops, transcendentals=0,
                                      bytes_accessed=bytes_accessed),
    )(kg, vg, *extra, W1, W2, W3, Bs)

    return ck.reshape(B, H, Sout, D), cv.reshape(B, H, Sout, D)


class KVCacheLinearCompressor:
    """JAX/Pallas port of the PyTorch KVCacheLinearCompressor (forward / eval only)."""

    def __init__(self, n_layer, nhead, d_model, compression_factor=2, min_seq_len=8,
                 *, key, dtype=jnp.float32, compute_dtype=jnp.bfloat16):
        self.n_layer = n_layer
        self.nhead = nhead
        self.d_model = d_model
        self.head_dim = d_model // nhead
        self.compression_factor = compression_factor
        self.min_seq_len = min_seq_len
        self.dtype = dtype
        self.compute_dtype = compute_dtype

        din = self.head_dim * compression_factor
        d = self.head_dim

        def init_one(k):
            kw1, kw2, kw3, kb = jax.random.split(k, 4)
            w1 = jax.random.normal(kw1, (din, d), dtype) / math.sqrt(din)
            w2 = jax.random.normal(kw2, (d, d), dtype) / math.sqrt(d)
            w3 = jax.random.normal(kw3, (d, d), dtype) / math.sqrt(d)
            b = 0.1 * jax.random.normal(kb, (3, d), dtype)      # rows: b1, b2, b3
            return w1, w2, w3, b

        keys = jax.random.split(key, 2 * n_layer)
        self.params = []
        for l in range(n_layer):
            w1k, w2k, w3k, bk = init_one(keys[2 * l])        # K-path params
            w1v, w2v, w3v, bv = init_one(keys[2 * l + 1])    # V-path params
            self.params.append((jnp.stack([w1k, w1v]),       # (2, Din, D)
                                jnp.stack([w2k, w2v]),       # (2, D, D)
                                jnp.stack([w3k, w3v]),       # (2, D, D)
                                jnp.stack([bk, bv])))        # (2, 3, D)

    def compress_layer(self, layer_cache, layer_idx):
        k, v = layer_cache
        S = k.shape[2]
        if S // self.compression_factor < self.min_seq_len:
            return (k, v)
        return compress_kv_pair(k, v, *self.params[layer_idx],
                                cf=self.compression_factor,
                                compute_dtype=self.compute_dtype)

    def __call__(self, kv_cache):
        return [self.compress_layer(lc, i) for i, lc in enumerate(kv_cache)]


if __name__ == "__main__":
    # hidden=256, 2 KV heads -> head_dim=128 (lane-dense), 2 layers, batch=2,
    # seq_len=33 so one leftover token exercises the in-kernel tail-copy path.
    n_layer = 2
    nhead = 2
    d_model = 256
    compression_factor = 2
    min_seq_len = 8
    batch = 2
    seq_len = 33
    head_dim = d_model // nhead

    root = jax.random.PRNGKey(0)
    param_key, data_key = jax.random.split(root)
    model = KVCacheLinearCompressor(n_layer, nhead, d_model, compression_factor,
                                    min_seq_len, key=param_key)

    dkeys = jax.random.split(data_key, 2 * n_layer)
    kv_cache = []
    for l in range(n_layer):
        k = jax.random.normal(dkeys[2 * l], (batch, nhead, seq_len, head_dim), jnp.float32)
        v = jax.random.normal(dkeys[2 * l + 1], (batch, nhead, seq_len, head_dim), jnp.float32)
        kv_cache.append((k, v))

    out = jax.block_until_ready(model(kv_cache))

    # Pure-JAX reference with the SAME bf16 MXU casting (dropout = identity in eval).
    def ref_mlp(x, w1, w2, w3, b):
        cd = jnp.bfloat16
        h = jnp.dot(x.astype(cd), w1.astype(cd), preferred_element_type=jnp.float32) + b[0]
        h = jnp.maximum(h, 0.0)
        h = jnp.dot(h.astype(cd), w2.astype(cd), preferred_element_type=jnp.float32) + b[1]
        h = jnp.maximum(h, 0.0)
        h = jnp.dot(h.astype(cd), w3.astype(cd), preferred_element_type=jnp.float32) + b[2]
        return h

    def ref_one(x, w1, w2, w3, b):
        B, H, S, D = x.shape
        cf = compression_factor
        Sc = S // cf
        cl = Sc * cf
        xg = x[:, :, :cl, :].reshape(B, H, Sc, D * cf)
        y = ref_mlp(xg.reshape(-1, D * cf), w1, w2, w3, b)
        y = y.reshape(B, H, Sc, D).astype(x.dtype)
        if S > cl:
            y = jnp.concatenate([y, x[:, :, cl:, :]], axis=2)
        return y

    ok = True
    for l, (ck, cv) in enumerate(out):
        k, v = kv_cache[l]
        W1, W2, W3, Bs = model.params[l]
        rk = ref_one(k, W1[0], W2[0], W3[0], Bs[0])
        rv = ref_one(v, W1[1], W2[1], W3[1], Bs[1])
        ok &= (ck.shape == rk.shape) and (cv.shape == rv.shape)
        ok &= bool(jnp.allclose(ck, rk, atol=1e-2, rtol=1e-2))
        ok &= bool(jnp.allclose(cv, rv, atol=1e-2, rtol=1e-2))

    # tail == 0 (fully copy-free) path.
    k32 = jax.random.normal(jax.random.PRNGKey(7), (batch, nhead, 32, head_dim), jnp.float32)
    v32 = jax.random.normal(jax.random.PRNGKey(8), (batch, nhead, 32, head_dim), jnp.float32)
    ck32, cv32 = jax.block_until_ready(model.compress_layer((k32, v32), 0))
    W1, W2, W3, Bs = model.params[0]
    ok &= bool(jnp.allclose(ck32, ref_one(k32, W1[0], W2[0], W3[0], Bs[0]), atol=1e-2, rtol=1e-2))
    ok &= bool(jnp.allclose(cv32, ref_one(v32, W1[1], W2[1], W3[1], Bs[1]), atol=1e-2, rtol=1e-2))

    # min_seq_len pass-through path (no kernel launch, identity).
    short_k = jnp.ones((batch, nhead, 10, head_dim), jnp.float32)
    short_v = jnp.ones((batch, nhead, 10, head_dim), jnp.float32)
    pk, pv = model.compress_layer((short_k, short_v), 0)
    ok &= (pk.shape == short_k.shape) and (pv.shape == short_v.shape)

    assert ok, "mismatch vs reference"
    print("KERNEL_OK")
</pallas_src>

<mosaic_0001>
module attributes {stable_mosaic.version = 11 : i64} {
  func.func @_kv_compress_kernel(%arg0: i32, %arg1: memref<1x16x256xf32, #tpu.memory_space<vmem>>, %arg2: memref<1x16x256xf32, #tpu.memory_space<vmem>>, %arg3: memref<1x1x128xf32, #tpu.memory_space<vmem>>, %arg4: memref<1x1x128xf32, #tpu.memory_space<vmem>>, %arg5: memref<2x256x128xf32, #tpu.memory_space<vmem>>, %arg6: memref<2x128x128xf32, #tpu.memory_space<vmem>>, %arg7: memref<2x128x128xf32, #tpu.memory_space<vmem>>, %arg8: memref<2x3x128xf32, #tpu.memory_space<vmem>>, %arg9: memref<1x17x128xf32, #tpu.memory_space<vmem>>, %arg10: memref<1x17x128xf32, #tpu.memory_space<vmem>>) attributes {dimension_semantics = [#tpu.dimension_semantics<parallel>], iteration_bounds = array<i64: 4>, scalar_prefetch = 0 : i64, scratch_operands = 0 : i64, tpu.core_type = #tpu.core_type<tc>, window_params = [{transform_indices = @transform_0, window_bounds = array<i64: 1, 16, 256>}, {transform_indices = @transform_1, window_bounds = array<i64: 1, 16, 256>}, {transform_indices = @transform_2, window_bounds = array<i64: 1, 1, 128>}, {transform_indices = @transform_3, window_bounds = array<i64: 1, 1, 128>}, {pipeline_mode = #tpu.pipeline_mode<synchronous>, transform_indices = @transform_4, window_bounds = array<i64: 2, 256, 128>}, {pipeline_mode = #tpu.pipeline_mode<synchronous>, transform_indices = @transform_5, window_bounds = array<i64: 2, 128, 128>}, {pipeline_mode = #tpu.pipeline_mode<synchronous>, transform_indices = @transform_6, window_bounds = array<i64: 2, 128, 128>}, {pipeline_mode = #tpu.pipeline_mode<synchronous>, transform_indices = @transform_7, window_bounds = array<i64: 2, 3, 128>}, {transform_indices = @transform_8, window_bounds = array<i64: 1, 17, 128>}, {transform_indices = @transform_9, window_bounds = array<i64: 1, 17, 128>}]} {
    %c0 = arith.constant 0 : index
    %c0_0 = arith.constant 0 : index
    %c0_1 = arith.constant 0 : index
    %0 = vector.load %arg1[%c0, %c0_0, %c0_1] : memref<1x16x256xf32, #tpu.memory_space<vmem>>, vector<1x16x256xf32>
    %1 = vector.shape_cast %0 : vector<1x16x256xf32> to vector<16x256xf32>
    %c0_2 = arith.constant 0 : index
    %c0_3 = arith.constant 0 : index
    %c0_4 = arith.constant 0 : index
    %2 = vector.load %arg5[%c0_2, %c0_3, %c0_4] : memref<2x256x128xf32, #tpu.memory_space<vmem>>, vector<1x256x128xf32>
    %3 = vector.shape_cast %2 : vector<1x256x128xf32> to vector<256x128xf32>
    %4 = arith.truncf %3 : vector<256x128xf32> to vector<256x128xbf16>
    %c0_5 = arith.constant 0 : index
    %c0_6 = arith.constant 0 : index
    %c0_7 = arith.constant 0 : index
    %5 = vector.load %arg6[%c0_5, %c0_6, %c0_7] : memref<2x128x128xf32, #tpu.memory_space<vmem>>, vector<1x128x128xf32>
    %6 = vector.shape_cast %5 : vector<1x128x128xf32> to vector<128x128xf32>
    %7 = arith.truncf %6 : vector<128x128xf32> to vector<128x128xbf16>
    %c0_8 = arith.constant 0 : index
    %c0_9 = arith.constant 0 : index
    %c0_10 = arith.constant 0 : index
    %8 = vector.load %arg7[%c0_8, %c0_9, %c0_10] : memref<2x128x128xf32, #tpu.memory_space<vmem>>, vector<1x128x128xf32>
    %9 = vector.shape_cast %8 : vector<1x128x128xf32> to vector<128x128xf32>
    %10 = arith.truncf %9 : vector<128x128xf32> to vector<128x128xbf16>
    %c0_11 = arith.constant 0 : index
    %c0_12 = arith.constant 0 : index
    %c0_13 = arith.constant 0 : index
    %11 = vector.load %arg8[%c0_11, %c0_12, %c0_13] : memref<2x3x128xf32, #tpu.memory_space<vmem>>, vector<1x3x128xf32>
    %12 = vector.shape_cast %11 : vector<1x3x128xf32> to vector<3x128xf32>
    %13 = arith.truncf %1 : vector<16x256xf32> to vector<16x256xbf16>
    %cst = arith.constant dense<0.000000e+00> : vector<16x128xf32>
    %14 = tpu.matmul %13, %4, %cst {dimension_numbers = #tpu.dot_dimension_numbers<[1], [0], [0], [1], [0, 0, 1, 1], [], []>} : vector<16x256xbf16>, vector<256x128xbf16>, vector<16x128xf32> -> vector<16x128xf32>
    %15 = vector.extract_strided_slice %12 {offsets = [0, 0], sizes = [1, 128], strides = [1, 1]} : vector<3x128xf32> to vector<1x128xf32>
    %16 = vector.broadcast %15 : vector<1x128xf32> to vector<16x128xf32>
    %17 = arith.addf %14, %16 : vector<16x128xf32>
    %cst_14 = arith.constant 0.000000e+00 : f32
    %18 = vector.broadcast %cst_14 : f32 to vector<16x128xf32>
    %19 = arith.maximumf %17, %18 : vector<16x128xf32>
    %20 = arith.truncf %19 : vector<16x128xf32> to vector<16x128xbf16>
    %cst_15 = arith.constant dense<0.000000e+00> : vector<16x128xf32>
    %21 = tpu.matmul %20, %7, %cst_15 {dimension_numbers = #tpu.dot_dimension_numbers<[1], [0], [0], [1], [0, 0, 1, 1], [], []>} : vector<16x128xbf16>, vector<128x128xbf16>, vector<16x128xf32> -> vector<16x128xf32>
    %22 = vector.extract_strided_slice %12 {offsets = [1, 0], sizes = [1, 128], strides = [1, 1]} : vector<3x128xf32> to vector<1x128xf32>
    %23 = vector.broadcast %22 : vector<1x128xf32> to vector<16x128xf32>
    %24 = arith.addf %21, %23 : vector<16x128xf32>
    %cst_16 = arith.constant 0.000000e+00 : f32
    %25 = vector.broadcast %cst_16 : f32 to vector<16x128xf32>
    %26 = arith.maximumf %24, %25 : vector<16x128xf32>
    %27 = arith.truncf %26 : vector<16x128xf32> to vector<16x128xbf16>
    %cst_17 = arith.constant dense<0.000000e+00> : vector<16x128xf32>
    %28 = tpu.matmul %27, %10, %cst_17 {dimension_numbers = #tpu.dot_dimension_numbers<[1], [0], [0], [1], [0, 0, 1, 1], [], []>} : vector<16x128xbf16>, vector<128x128xbf16>, vector<16x128xf32> -> vector<16x128xf32>
    %29 = vector.extract_strided_slice %12 {offsets = [2, 0], sizes = [1, 128], strides = [1, 1]} : vector<3x128xf32> to vector<1x128xf32>
    %30 = vector.broadcast %29 : vector<1x128xf32> to vector<16x128xf32>
    %31 = arith.addf %28, %30 : vector<16x128xf32>
    %c0_18 = arith.constant 0 : index
    %c0_19 = arith.constant 0 : index
    %c0_20 = arith.constant 0 : index
    %32 = vector.load %arg9[%c0_18, %c0_19, %c0_20] : memref<1x17x128xf32, #tpu.memory_space<vmem>>, vector<1x16x128xf32>
    %33 = vector.shape_cast %32 : vector<1x16x128xf32> to vector<16x128xf32>
    %34 = vector.shape_cast %31 : vector<16x128xf32> to vector<1x16x128xf32>
    tpu.vector_store %arg9[%c0_18, %c0_19, %c0_20], %34 {strides = array<i32>} : memref<1x17x128xf32, #tpu.memory_space<vmem>>, vector<1x16x128xf32>,
    %c0_21 = arith.constant 0 : index
    %c0_22 = arith.constant 0 : index
    %c0_23 = arith.constant 0 : index
    %35 = vector.load %arg3[%c0_21, %c0_22, %c0_23] : memref<1x1x128xf32, #tpu.memory_space<vmem>>, vector<1x1x128xf32>
    %36 = vector.shape_cast %35 : vector<1x1x128xf32> to vector<1x128xf32>
    %c0_24 = arith.constant 0 : index
    %c16 = arith.constant 16 : index
    %c0_25 = arith.constant 0 : index
    %37 = vector.load %arg9[%c0_24, %c16, %c0_25] : memref<1x17x128xf32, #tpu.memory_space<vmem>>, vector<1x1x128xf32>
    %38 = vector.shape_cast %37 : vector<1x1x128xf32> to vector<1x128xf32>
    %39 = vector.shape_cast %36 : vector<1x128xf32> to vector<1x1x128xf32>
    tpu.vector_store %arg9[%c0_24, %c16, %c0_25], %39 {strides = array<i32>} : memref<1x17x128xf32, #tpu.memory_space<vmem>>, vector<1x1x128xf32>,
    %c0_26 = arith.constant 0 : index
    %c0_27 = arith.constant 0 : index
    %c0_28 = arith.constant 0 : index
    %40 = vector.load %arg2[%c0_26, %c0_27, %c0_28] : memref<1x16x256xf32, #tpu.memory_space<vmem>>, vector<1x16x256xf32>
    %41 = vector.shape_cast %40 : vector<1x16x256xf32> to vector<16x256xf32>
    %c1 = arith.constant 1 : index
    %c0_29 = arith.constant 0 : index
    %c0_30 = arith.constant 0 : index
    %42 = vector.load %arg5[%c1, %c0_29, %c0_30] : memref<2x256x128xf32, #tpu.memory_space<vmem>>, vector<1x256x128xf32>
    %43 = vector.shape_cast %42 : vector<1x256x128xf32> to vector<256x128xf32>
    %44 = arith.truncf %43 : vector<256x128xf32> to vector<256x128xbf16>
    %c1_31 = arith.constant 1 : index
    %c0_32 = arith.constant 0 : index
    %c0_33 = arith.constant 0 : index
    %45 = vector.load %arg6[%c1_31, %c0_32, %c0_33] : memref<2x128x128xf32, #tpu.memory_space<vmem>>, vector<1x128x128xf32>
    %46 = vector.shape_cast %45 : vector<1x128x128xf32> to vector<128x128xf32>
    %47 = arith.truncf %46 : vector<128x128xf32> to vector<128x128xbf16>
    %c1_34 = arith.constant 1 : index
    %c0_35 = arith.constant 0 : index
    %c0_36 = arith.constant 0 : index
    %48 = vector.load %arg7[%c1_34, %c0_35, %c0_36] : memref<2x128x128xf32, #tpu.memory_space<vmem>>, vector<1x128x128xf32>
    %49 = vector.shape_cast %48 : vector<1x128x128xf32> to vector<128x128xf32>
    %50 = arith.truncf %49 : vector<128x128xf32> to vector<128x128xbf16>
    %c1_37 = arith.constant 1 : index
    %c0_38 = arith.constant 0 : index
    %c0_39 = arith.constant 0 : index
    %51 = vector.load %arg8[%c1_37, %c0_38, %c0_39] : memref<2x3x128xf32, #tpu.memory_space<vmem>>, vector<1x3x128xf32>
    %52 = vector.shape_cast %51 : vector<1x3x128xf32> to vector<3x128xf32>
    %53 = arith.truncf %41 : vector<16x256xf32> to vector<16x256xbf16>
    %cst_40 = arith.constant dense<0.000000e+00> : vector<16x128xf32>
    %54 = tpu.matmul %53, %44, %cst_40 {dimension_numbers = #tpu.dot_dimension_numbers<[1], [0], [0], [1], [0, 0, 1, 1], [], []>} : vector<16x256xbf16>, vector<256x128xbf16>, vector<16x128xf32> -> vector<16x128xf32>
    %55 = vector.extract_strided_slice %52 {offsets = [0, 0], sizes = [1, 128], strides = [1, 1]} : vector<3x128xf32> to vector<1x128xf32>
    %56 = vector.broadcast %55 : vector<1x128xf32> to vector<16x128xf32>
    %57 = arith.addf %54, %56 : vector<16x128xf32>
    %cst_41 = arith.constant 0.000000e+00 : f32
    %58 = vector.broadcast %cst_41 : f32 to vector<16x128xf32>
    %59 = arith.maximumf %57, %58 : vector<16x128xf32>
    %60 = arith.truncf %59 : vector<16x128xf32> to vector<16x128xbf16>
    %cst_42 = arith.constant dense<0.000000e+00> : vector<16x128xf32>
    %61 = tpu.matmul %60, %47, %cst_42 {dimension_numbers = #tpu.dot_dimension_numbers<[1], [0], [0], [1], [0, 0, 1, 1], [], []>} : vector<16x128xbf16>, vector<128x128xbf16>, vector<16x128xf32> -> vector<16x128xf32>
    %62 = vector.extract_strided_slice %52 {offsets = [1, 0], sizes = [1, 128], strides = [1, 1]} : vector<3x128xf32> to vector<1x128xf32>
    %63 = vector.broadcast %62 : vector<1x128xf32> to vector<16x128xf32>
    %64 = arith.addf %61, %63 : vector<16x128xf32>
    %cst_43 = arith.constant 0.000000e+00 : f32
    %65 = vector.broadcast %cst_43 : f32 to vector<16x128xf32>
    %66 = arith.maximumf %64, %65 : vector<16x128xf32>
    %67 = arith.truncf %66 : vector<16x128xf32> to vector<16x128xbf16>
    %cst_44 = arith.constant dense<0.000000e+00> : vector<16x128xf32>
    %68 = tpu.matmul %67, %50, %cst_44 {dimension_numbers = #tpu.dot_dimension_numbers<[1], [0], [0], [1], [0, 0, 1, 1], [], []>} : vector<16x128xbf16>, vector<128x128xbf16>, vector<16x128xf32> -> vector<16x128xf32>
    %69 = vector.extract_strided_slice %52 {offsets = [2, 0], sizes = [1, 128], strides = [1, 1]} : vector<3x128xf32> to vector<1x128xf32>
    %70 = vector.broadcast %69 : vector<1x128xf32> to vector<16x128xf32>
    %71 = arith.addf %68, %70 : vector<16x128xf32>
    %c0_45 = arith.constant 0 : index
    %c0_46 = arith.constant 0 : index
    %c0_47 = arith.constant 0 : index
    %72 = vector.load %arg10[%c0_45, %c0_46, %c0_47] : memref<1x17x128xf32, #tpu.memory_space<vmem>>, vector<1x16x128xf32>
    %73 = vector.shape_cast %72 : vector<1x16x128xf32> to vector<16x128xf32>
    %74 = vector.shape_cast %71 : vector<16x128xf32> to vector<1x16x128xf32>
    tpu.vector_store %arg10[%c0_45, %c0_46, %c0_47], %74 {strides = array<i32>} : memref<1x17x128xf32, #tpu.memory_space<vmem>>, vector<1x16x128xf32>,
    %c0_48 = arith.constant 0 : index
    %c0_49 = arith.constant 0 : index
    %c0_50 = arith.constant 0 : index
    %75 = vector.load %arg4[%c0_48, %c0_49, %c0_50] : memref<1x1x128xf32, #tpu.memory_space<vmem>>, vector<1x1x128xf32>
    %76 = vector.shape_cast %75 : vector<1x1x128xf32> to vector<1x128xf32>
    %c0_51 = arith.constant 0 : index
    %c16_52 = arith.constant 16 : index
    %c0_53 = arith.constant 0 : index
    %77 = vector.load %arg10[%c0_51, %c16_52, %c0_53] : memref<1x17x128xf32, #tpu.memory_space<vmem>>, vector<1x1x128xf32>
    %78 = vector.shape_cast %77 : vector<1x1x128xf32> to vector<1x128xf32>
    %79 = vector.shape_cast %76 : vector<1x128xf32> to vector<1x1x128xf32>
    tpu.vector_store %arg10[%c0_51, %c16_52, %c0_53], %79 {strides = array<i32>} : memref<1x17x128xf32, #tpu.memory_space<vmem>>, vector<1x1x128xf32>,
    return
  }
  func.func @transform_0(%arg0: i32) -> (i32, i32, i32) {
    %c0_i32 = arith.constant 0 : i32
    %c0_i32_0 = arith.constant 0 : i32
    %c0_i32_1 = arith.constant 0 : i32
    return %arg0, %c0_i32, %c0_i32_0 : i32, i32, i32
  }
  func.func @transform_1(%arg0: i32) -> (i32, i32, i32) {
    %c0_i32 = arith.constant 0 : i32
    %c0_i32_0 = arith.constant 0 : i32
    %c0_i32_1 = arith.constant 0 : i32
    return %arg0, %c0_i32, %c0_i32_0 : i32, i32, i32
  }
  func.func @transform_2(%arg0: i32) -> (i32, i32, i32) {
    %c0_i32 = arith.constant 0 : i32
    %c0_i32_0 = arith.constant 0 : i32
    %c0_i32_1 = arith.constant 0 : i32
    return %arg0, %c0_i32, %c0_i32_0 : i32, i32, i32
  }
  func.func @transform_3(%arg0: i32) -> (i32, i32, i32) {
    %c0_i32 = arith.constant 0 : i32
    %c0_i32_0 = arith.constant 0 : i32
    %c0_i32_1 = arith.constant 0 : i32
    return %arg0, %c0_i32, %c0_i32_0 : i32, i32, i32
  }
  func.func @transform_4(%arg0: i32) -> (i32, i32, i32) {
    %c0_i32 = arith.constant 0 : i32
    %c0_i32_0 = arith.constant 0 : i32
    %c0_i32_1 = arith.constant 0 : i32
    %c0_i32_2 = arith.constant 0 : i32
    return %c0_i32, %c0_i32_0, %c0_i32_1 : i32, i32, i32
  }
  func.func @transform_5(%arg0: i32) -> (i32, i32, i32) {
    %c0_i32 = arith.constant 0 : i32
    %c0_i32_0 = arith.constant 0 : i32
    %c0_i32_1 = arith.constant 0 : i32
    %c0_i32_2 = arith.constant 0 : i32
    return %c0_i32, %c0_i32_0, %c0_i32_1 : i32, i32, i32
  }
  func.func @transform_6(%arg0: i32) -> (i32, i32, i32) {
    %c0_i32 = arith.constant 0 : i32
    %c0_i32_0 = arith.constant 0 : i32
    %c0_i32_1 = arith.constant 0 : i32
    %c0_i32_2 = arith.constant 0 : i32
    return %c0_i32, %c0_i32_0, %c0_i32_1 : i32, i32, i32
  }
  func.func @transform_7(%arg0: i32) -> (i32, i32, i32) {
    %c0_i32 = arith.constant 0 : i32
    %c0_i32_0 = arith.constant 0 : i32
    %c0_i32_1 = arith.constant 0 : i32
    %c0_i32_2 = arith.constant 0 : i32
    return %c0_i32, %c0_i32_0, %c0_i32_1 : i32, i32, i32
  }
  func.func @transform_8(%arg0: i32) -> (i32, i32, i32) {
    %c0_i32 = arith.constant 0 : i32
    %c0_i32_0 = arith.constant 0 : i32
    %c0_i32_1 = arith.constant 0 : i32
    return %arg0, %c0_i32, %c0_i32_0 : i32, i32, i32
  }
  func.func @transform_9(%arg0: i32) -> (i32, i32, i32) {
    %c0_i32 = arith.constant 0 : i32
    %c0_i32_0 = arith.constant 0 : i32
    %c0_i32_1 = arith.constant 0 : i32
    return %arg0, %c0_i32, %c0_i32_0 : i32, i32, i32
  }
}

</mosaic_0001>

<llo_original>
// kernel: tpu_custom_call.1
$region0: #{tpu_custom_call.1}
  #allocation0 [shape = 'u32[]', space=smem, size = 0x4, offset = 0x4, fixed_abs, tag = 'smem constant byte address 0x4 - core index']
  #allocation1 [shape = 'u32[72,128]{1,0:T(1,128)}', space=vmem, size = 0x9000, scoped, tag = 'internal scratch']
  %s0 = inlined_call_operand.hbm [shape: f32[4,16,256], index: 0, kind: input, shape index: {}]
  %s1 = inlined_call_operand.hbm [shape: f32[4,16,256], index: 1, kind: input, shape index: {}]
  %s2 = inlined_call_operand.vmem [shape: f32[4,1,128], index: 2, kind: input, shape index: {}]
  %s3 = inlined_call_operand.vmem [shape: f32[4,1,128], index: 3, kind: input, shape index: {}]
  %s4 = inlined_call_operand.hbm [shape: f32[2,256,128], index: 4, kind: input, shape index: {}]
  %s5 = inlined_call_operand.hbm [shape: f32[2,128,128], index: 5, kind: input, shape index: {}]
  %s6 = inlined_call_operand.hbm [shape: f32[2,128,128], index: 6, kind: input, shape index: {}]
  %s7 = inlined_call_operand.vmem [shape: f32[2,3,128], index: 7, kind: input, shape index: {}]
  %s8 = inlined_call_operand.vmem [shape: f32[4,17,128], index: 8, kind: output, shape index: {0}]
  %s9 = inlined_call_operand.vmem [shape: f32[4,17,128], index: 9, kind: output, shape index: {1}]
  %10 = xla_tuple %s8, %s9
  %s11 = sld [smem:[#allocation0]]
  $region93: #{tpu_custom_call.1} parent=0
    _
  %s13 = ssub.s32 1, %s11
  %s14 = scalar_select 0, %s13, %s11
  $region1: #{tpu_custom_call.1} parent=0
    #allocation2 [shape = 'u8[32768]{0}', space=vmem, size = 0x8000, scoped, tag = 'input window, operand 0']
    #allocation3 [shape = 's32[2]{0}', space=sflag, size = 0x8, scoped, tag = 'scoped memory for tpu_custom_call.1']
    #allocation4 [shape = 'u8[32768]{0}', space=vmem, size = 0x8000, scoped, tag = 'input window, operand 1']
    #allocation5 [shape = 's32[2]{0}', space=sflag, size = 0x8, scoped, tag = 'scoped memory for tpu_custom_call.1']
    #allocation6 [shape = 'u8[262144]{0}', space=vmem, size = 0x40000, scoped, tag = 'input window, operand 4, single buffered']
    #allocation7 [shape = 'u8[131072]{0}', space=vmem, size = 0x20000, scoped, tag = 'input window, operand 5, single buffered']
    #allocation8 [shape = 's32[1]{0}', space=sflag, size = 0x4, scoped, tag = 'scoped memory for tpu_custom_call.1']
    #allocation9 [shape = 'u8[131072]{0}', space=vmem, size = 0x20000, scoped, tag = 'input window, operand 6, single buffered']
    %15 = vsyncpa [#allocation3], 0
    %s16 = scalar_lea.sflag [#allocation3], 1
    %17 = vsyncpa %s16, 0
    %18 = vsyncpa [#allocation5], 0
    %s19 = scalar_lea.sflag [#allocation5], 1
    %20 = vsyncpa %s19, 0
    %21 = vsyncpa [#allocation8], 0
    loop: start=0, step=1, limit=6
    $region2: #{tpu_custom_call.1} parent=1 // loop_pre_header
      _
    $region3: #{tpu_custom_call.1} parent=1 // loop_header
      %s23 = sphi 0, %s27
      %p24 = scmp.ge.s32.totalorder %s23, 6
      %s33 = sphi 0, %s35
      %s36 = sphi 0, %s33
      %s37 = sphi 0, %s36
      %s53 = sphi 0, %s37
      %s59 = sphi 0, %s61
      %s62 = sphi 0, %s59
      %s63 = sphi 0, %s62
      %s79 = sphi 0, %s63
      %s85 = sphi 0, %s87
      %s88 = sphi 0, %s85
      %s89 = sphi 0, %s88
      %s105 = sphi 0, %s89
      %s111 = sphi 0, %s113
      %s114 = sphi 0, %s111
      %s115 = sphi 0, %s114
      %s131 = sphi 0, %s115
      %s135 = sphi 0, %s135
      %s137 = sphi 0, %s135
      %s138 = sphi 0, %s137
      %s152 = sphi 0, %s138
      %s156 = sphi 0, %s156
      %s158 = sphi 0, %s156
      %s159 = sphi 0, %s158
      %s173 = sphi 0, %s159
      %s177 = sphi 0, %s177
      %s179 = sphi 0, %s177
      %s180 = sphi 0, %s179
      %s194 = sphi 0, %s180
      %s198 = sphi 0, %s198
      %s200 = sphi 0, %s198
      %s201 = sphi 0, %s200
      %s215 = sphi 0, %s201
      %s221 = sphi 0, %s223
      %s224 = sphi 0, %s221
      %s225 = sphi 0, %s224
      %s241 = sphi 0, %s225
      %s247 = sphi 0, %s249
      %s250 = sphi 0, %s247
      %s251 = sphi 0, %s250
      %s267 = sphi 0, %s251
    $region4: #{tpu_custom_call.1} parent=1 // loop_header_branch
      %26 = sbr.rel (%p24) target = $region8
    $region5: #{tpu_custom_call.1} parent=1 // loop_body
      %s28 = ssub.s32 %s23, 1
      %s29 = ssub.s32 %s23, 2
      %s30 = sadd.s32 %s23, 1
      %s31 = ssub.s32 %s23, %s30
      %p32 = scmp.eq.s32.totalorder %s31, 0
      %s34 = sadd.s32 %s33, 1
      %s35 = scalar_select %p32, %s33, %s34
      %p38 = pneg %p32
      %p39 = scmp.eq.s32.totalorder %s23, 3
      %p40 = por %p38, %p39
      %p41 = scmp.ne.s32.totalorder %s33, %s36
      %p42 = scmp.eq.s32.totalorder %s23, 0
      %p43 = por %p41, %p42
      %p44 = scmp.ne.s32.totalorder %s33, %s36
      %p45 = scmp.eq.s32.totalorder %s28, 3
      %p46 = por %p44, %p45
      %p47 = scmp.ne.s32.totalorder %s36, %s37
      %p48 = scmp.eq.s32.totalorder %s28, 0
      %p49 = por %p47, %p48
      %p50 = scmp.ne.s32.totalorder %s36, %s37
      %p51 = scmp.eq.s32.totalorder %s29, 3
      %p52 = por %p50, %p51
      %p54 = scmp.ne.s32.totalorder %s37, %s53
      %p55 = scmp.eq.s32.totalorder %s29, 0
      %p56 = por %p54, %p55
      %s57 = ssub.s32 %s23, %s30
      %p58 = scmp.eq.s32.totalorder %s57, 0
      %s60 = sadd.s32 %s59, 1
      %s61 = scalar_select %p58, %s59, %s60
      %p64 = pneg %p58
      %p65 = scmp.eq.s32.totalorder %s23, 3
      %p66 = por %p64, %p65
      %p67 = scmp.ne.s32.totalorder %s59, %s62
      %p68 = scmp.eq.s32.totalorder %s23, 0
      %p69 = por %p67, %p68
      %p70 = scmp.ne.s32.totalorder %s59, %s62
      %p71 = scmp.eq.s32.totalorder %s28, 3
      %p72 = por %p70, %p71
      %p73 = scmp.ne.s32.totalorder %s62, %s63
      %p74 = scmp.eq.s32.totalorder %s28, 0
      %p75 = por %p73, %p74
      %p76 = scmp.ne.s32.totalorder %s62, %s63
      %p77 = scmp.eq.s32.totalorder %s29, 3
      %p78 = por %p76, %p77
      %p80 = scmp.ne.s32.totalorder %s63, %s79
      %p81 = scmp.eq.s32.totalorder %s29, 0
      %p82 = por %p80, %p81
      %s83 = ssub.s32 %s23, %s30
      %p84 = scmp.eq.s32.totalorder %s83, 0
      %s86 = sadd.s32 %s85, 1
      %s87 = scalar_select %p84, %s85, %s86
      %p90 = pneg %p84
      %p91 = scmp.eq.s32.totalorder %s23, 3
      %p92 = por %p90, %p91
      %p93 = scmp.ne.s32.totalorder %s85, %s88
      %p94 = scmp.eq.s32.totalorder %s23, 0
      %p95 = por %p93, %p94
      %p96 = scmp.ne.s32.totalorder %s85, %s88
      %p97 = scmp.eq.s32.totalorder %s28, 3
      %p98 = por %p96, %p97
      %p99 = scmp.ne.s32.totalorder %s88, %s89
      %p100 = scmp.eq.s32.totalorder %s28, 0
      %p101 = por %p99, %p100
      %p102 = scmp.ne.s32.totalorder %s88, %s89
      %p103 = scmp.eq.s32.totalorder %s29, 3
      %p104 = por %p102, %p103
      %p106 = scmp.ne.s32.totalorder %s89, %s105
      %p107 = scmp.eq.s32.totalorder %s29, 0
      %p108 = por %p106, %p107
      %s109 = ssub.s32 %s23, %s30
      %p110 = scmp.eq.s32.totalorder %s109, 0
      %s112 = sadd.s32 %s111, 1
      %s113 = scalar_select %p110, %s111, %s112
      %p116 = pneg %p110
      %p117 = scmp.eq.s32.totalorder %s23, 3
      %p118 = por %p116, %p117
      %p119 = scmp.ne.s32.totalorder %s111, %s114
      %p120 = scmp.eq.s32.totalorder %s23, 0
      %p121 = por %p119, %p120
      %p122 = scmp.ne.s32.totalorder %s111, %s114
      %p123 = scmp.eq.s32.totalorder %s28, 3
      %p124 = por %p122, %p123
      %p125 = scmp.ne.s32.totalorder %s114, %s115
      %p126 = scmp.eq.s32.totalorder %s28, 0
      %p127 = por %p125, %p126
      %p128 = scmp.ne.s32.totalorder %s114, %s115
      %p129 = scmp.eq.s32.totalorder %s29, 3
      %p130 = por %p128, %p129
      %p132 = scmp.ne.s32.totalorder %s115, %s131
      %p133 = scmp.eq.s32.totalorder %s29, 0
      %p134 = por %p132, %p133
      %s136 = sadd.s32 %s135, 1
      %p139 = scmp.eq.s32.totalorder %s23, 3
      %p140 = scmp.ne.s32.totalorder %s135, %s137
      %p141 = scmp.eq.s32.totalorder %s23, 0
      %p142 = por %p140, %p141
      %p143 = scmp.ne.s32.totalorder %s135, %s137
      %p144 = scmp.eq.s32.totalorder %s28, 3
      %p145 = por %p143, %p144
      %p146 = scmp.ne.s32.totalorder %s137, %s138
      %p147 = scmp.eq.s32.totalorder %s28, 0
      %p148 = por %p146, %p147
      %p149 = scmp.ne.s32.totalorder %s137, %s138
      %p150 = scmp.eq.s32.totalorder %s29, 3
      %p151 = por %p149, %p150
      %p153 = scmp.ne.s32.totalorder %s138, %s152
      %p154 = scmp.eq.s32.totalorder %s29, 0
      %p155 = por %p153, %p154
      %s157 = sadd.s32 %s156, 1
      %p160 = scmp.eq.s32.totalorder %s23, 3
      %p161 = scmp.ne.s32.totalorder %s156, %s158
      %p162 = scmp.eq.s32.totalorder %s23, 0
      %p163 = por %p161, %p162
      %p164 = scmp.ne.s32.totalorder %s156, %s158
      %p165 = scmp.eq.s32.totalorder %s28, 3
      %p166 = por %p164, %p165
      %p167 = scmp.ne.s32.totalorder %s158, %s159
      %p168 = scmp.eq.s32.totalorder %s28, 0
      %p169 = por %p167, %p168
      %p170 = scmp.ne.s32.totalorder %s158, %s159
      %p171 = scmp.eq.s32.totalorder %s29, 3
      %p172 = por %p170, %p171
      %p174 = scmp.ne.s32.totalorder %s159, %s173
      %p175 = scmp.eq.s32.totalorder %s29, 0
      %p176 = por %p174, %p175
      %s178 = sadd.s32 %s177, 1
      %p181 = scmp.eq.s32.totalorder %s23, 3
      %p182 = scmp.ne.s32.totalorder %s177, %s179
      %p183 = scmp.eq.s32.totalorder %s23, 0
      %p184 = por %p182, %p183
      %p185 = scmp.ne.s32.totalorder %s177, %s179
      %p186 = scmp.eq.s32.totalorder %s28, 3
      %p187 = por %p185, %p186
      %p188 = scmp.ne.s32.totalorder %s179, %s180
      %p189 = scmp.eq.s32.totalorder %s28, 0
      %p190 = por %p188, %p189
      %p191 = scmp.ne.s32.totalorder %s179, %s180
      %p192 = scmp.eq.s32.totalorder %s29, 3
      %p193 = por %p191, %p192
      %p195 = scmp.ne.s32.totalorder %s180, %s194
      %p196 = scmp.eq.s32.totalorder %s29, 0
      %p197 = por %p195, %p196
      %s199 = sadd.s32 %s198, 1
      %p202 = scmp.eq.s32.totalorder %s23, 3
      %p203 = scmp.ne.s32.totalorder %s198, %s200
      %p204 = scmp.eq.s32.totalorder %s23, 0
      %p205 = por %p203, %p204
      %p206 = scmp.ne.s32.totalorder %s198, %s200
      %p207 = scmp.eq.s32.totalorder %s28, 3
      %p208 = por %p206, %p207
      %p209 = scmp.ne.s32.totalorder %s200, %s201
      %p210 = scmp.eq.s32.totalorder %s28, 0
      %p211 = por %p209, %p210
      %p212 = scmp.ne.s32.totalorder %s200, %s201
      %p213 = scmp.eq.s32.totalorder %s29, 3
      %p214 = por %p212, %p213
      %p216 = scmp.ne.s32.totalorder %s201, %s215
      %p217 = scmp.eq.s32.totalorder %s29, 0
      %p218 = por %p216, %p217
      %s219 = ssub.s32 %s23, %s30
      %p220 = scmp.eq.s32.totalorder %s219, 0
      %s222 = sadd.s32 %s221, 1
      %s223 = scalar_select %p220, %s221, %s222
      %p226 = pneg %p220
      %p227 = scmp.eq.s32.totalorder %s23, 3
      %p228 = por %p226, %p227
      %p229 = scmp.ne.s32.totalorder %s221, %s224
      %p230 = scmp.eq.s32.totalorder %s23, 0
      %p231 = por %p229, %p230
      %p232 = scmp.ne.s32.totalorder %s221, %s224
      %p233 = scmp.eq.s32.totalorder %s28, 3
      %p234 = por %p232, %p233
      %p235 = scmp.ne.s32.totalorder %s224, %s225
      %p236 = scmp.eq.s32.totalorder %s28, 0
      %p237 = por %p235, %p236
      %p238 = scmp.ne.s32.totalorder %s224, %s225
      %p239 = scmp.eq.s32.totalorder %s29, 3
      %p240 = por %p238, %p239
      %p242 = scmp.ne.s32.totalorder %s225, %s241
      %p243 = scmp.eq.s32.totalorder %s29, 0
      %p244 = por %p242, %p243
      %s245 = ssub.s32 %s23, %s30
      %p246 = scmp.eq.s32.totalorder %s245, 0
      %s248 = sadd.s32 %s247, 1
      %s249 = scalar_select %p246, %s247, %s248
      %p252 = pneg %p246
      %p253 = scmp.eq.s32.totalorder %s23, 3
      %p254 = por %p252, %p253
      %p255 = scmp.ne.s32.totalorder %s247, %s250
      %p256 = scmp.eq.s32.totalorder %s23, 0
      %p257 = por %p255, %p256
      %p258 = scmp.ne.s32.totalorder %s247, %s250
      %p259 = scmp.eq.s32.totalorder %s28, 3
      %p260 = por %p258, %p259
      %p261 = scmp.ne.s32.totalorder %s250, %s251
      %p262 = scmp.eq.s32.totalorder %s28, 0
      %p263 = por %p261, %p262
      %p264 = scmp.ne.s32.totalorder %s250, %s251
      %p265 = scmp.eq.s32.totalorder %s29, 3
      %p266 = por %p264, %p265
      %p268 = scmp.ne.s32.totalorder %s251, %s267
      %p269 = scmp.eq.s32.totalorder %s29, 0
      %p270 = por %p268, %p269
      %p271 = scmp.le.s32.totalorder 1, %s23
      %p272 = scmp.lt.s32.totalorder %s23, 5
      %p273 = pnand %p271, %p272
      %p274 = pneg %p273
      // Predicated region
      $region9: #{tpu_custom_call.1} parent=5 // pred_check
        _
      $region10: #{tpu_custom_call.1} parent=5 // pred_check_branch
        %276 = sbr.rel (%p273) target = $region12
      $region11: #{tpu_custom_call.1} parent=5 // pred_region
        %s277 = ssub.s32 %s23, 1
        // Predicated region
        $region13: #{tpu_custom_call.1} parent=11 // pred_check
          %p278 = pneg %p148
        $region14: #{tpu_custom_call.1} parent=11 // pred_check_branch
          %280 = sbr.rel (%p278) target = $region16
        $region15: #{tpu_custom_call.1} parent=11 // pred_region
          %282 = vsyncadd [#allocation5], 0
          %s283 = sshll.u32 %s4, 4
          %s284 = int_to_ptr.hbm [resolvable:$true] %s283
          %s285 = sshll.u32 [#allocation6], 4
          %s286 = int_to_ptr.vmem [resolvable:$true] %s285
          %291 = dma.hbm_to_vmem [thread:$0]  %s284, 8192, %s286, [#allocation5], 128, 128, 8
        $region16: #{tpu_custom_call.1} parent=11 // pred_fallthru
          _
        // Predicated region
        $region17: #{tpu_custom_call.1} parent=11 // pred_check
          %p292 = pneg %p169
        $region18: #{tpu_custom_call.1} parent=11 // pred_check_branch
          %294 = sbr.rel (%p292) target = $region20
        $region19: #{tpu_custom_call.1} parent=11 // pred_region
          %296 = vsyncadd [#allocation8], 0
          %s297 = sshll.u32 %s5, 4
          %s298 = int_to_ptr.hbm [resolvable:$true] %s297
          %s299 = sshll.u32 [#allocation7], 4
          %s300 = int_to_ptr.vmem [resolvable:$true] %s299
          %305 = dma.hbm_to_vmem [thread:$0]  %s298, 4096, %s300, [#allocation8], 128, 128, 8
        $region20: #{tpu_custom_call.1} parent=11 // pred_fallthru
          _
        // Predicated region
        $region21: #{tpu_custom_call.1} parent=11 // pred_check
          %p306 = pneg %p190
        $region22: #{tpu_custom_call.1} parent=11 // pred_check_branch
          %308 = sbr.rel (%p306) target = $region24
        $region23: #{tpu_custom_call.1} parent=11 // pred_region
          %310 = vsyncadd [#allocation8], 0
          %s311 = sshll.u32 %s6, 4
          %s312 = int_to_ptr.hbm [resolvable:$true] %s311
          %s313 = sshll.u32 [#allocation9], 4
          %s314 = int_to_ptr.vmem [resolvable:$true] %s313
          %319 = dma.hbm_to_vmem [thread:$0]  %s312, 4096, %s314, [#allocation8], 128, 128, 8
        $region24: #{tpu_custom_call.1} parent=11 // pred_fallthru
          _
        // Predicated region
        $region25: #{tpu_custom_call.1} parent=11 // pred_check
          %p320 = pneg %p211
        $region26: #{tpu_custom_call.1} parent=11 // pred_check_branch
          %322 = sbr.rel (%p320) target = $region28
        $region27: #{tpu_custom_call.1} parent=11 // pred_region
          _
        $region28: #{tpu_custom_call.1} parent=11 // pred_fallthru
          _
      $region12: #{tpu_custom_call.1} parent=5 // pred_fallthru
        _
      %p323 = scmp.lt.s32.totalorder %s23, 4
      // Predicated region
      $region29: #{tpu_custom_call.1} parent=5 // pred_check
        %p324 = pneg %p323
      $region30: #{tpu_custom_call.1} parent=5 // pred_check_branch
        %326 = sbr.rel (%p324) target = $region32
      $region31: #{tpu_custom_call.1} parent=5 // pred_region
        // Predicated region
        $region33: #{tpu_custom_call.1} parent=31 // pred_check
          %p327 = pneg %p43
        $region34: #{tpu_custom_call.1} parent=31 // pred_check_branch
          %329 = sbr.rel (%p327) target = $region36
        $region35: #{tpu_custom_call.1} parent=31 // pred_region
          %s330 = sand.u32 %s33, 1
          %s331 = scalar_lea.sflag [#allocation3], %s330
          %s332 = sand.u32 %s33, 1
          %s333 = smul.addr %s332, 32
          %s334 = scalar_lea.vmem [#allocation2], %s333
          %336 = vsyncadd %s331, 0
          %s337 = smul.addr %s23, 4
          %s338 = smul.addr %s337, 8
          %s339 = scalar_lea.hbm %s0, %s338
          %s340 = sshll.u32 %s339, 4
          %s341 = int_to_ptr.hbm [resolvable:$true] %s340
          %s342 = sshll.u32 %s334, 4
          %s343 = int_to_ptr.vmem [resolvable:$true] %s342
          %348 = dma.hbm_to_vmem [thread:$0]  %s341, 512, %s343, %s331, 256, 256, 16
        $region36: #{tpu_custom_call.1} parent=31 // pred_fallthru
          _
        // Predicated region
        $region37: #{tpu_custom_call.1} parent=31 // pred_check
          %p349 = pneg %p69
        $region38: #{tpu_custom_call.1} parent=31 // pred_check_branch
          %351 = sbr.rel (%p349) target = $region40
        $region39: #{tpu_custom_call.1} parent=31 // pred_region
          %s352 = sand.u32 %s23, 1
          %s353 = scalar_lea.sflag [#allocation5], %s352
          %s354 = sand.u32 %s59, 1
          %s355 = smul.addr %s354, 32
          %s356 = scalar_lea.vmem [#allocation4], %s355
          %358 = vsyncadd %s353, 0
          %s359 = smul.addr %s23, 4
          %s360 = smul.addr %s359, 8
          %s361 = scalar_lea.hbm %s1, %s360
          %s362 = sshll.u32 %s361, 4
          %s363 = int_to_ptr.hbm [resolvable:$true] %s362
          %s364 = sshll.u32 %s356, 4
          %s365 = int_to_ptr.vmem [resolvable:$true] %s364
          %370 = dma.hbm_to_vmem [thread:$0]  %s363, 512, %s365, %s353, 256, 256, 16
        $region40: #{tpu_custom_call.1} parent=31 // pred_fallthru
          _
        // Predicated region
        $region41: #{tpu_custom_call.1} parent=31 // pred_check
          %p371 = pneg %p95
        $region42: #{tpu_custom_call.1} parent=31 // pred_check_branch
          %373 = sbr.rel (%p371) target = $region44
        $region43: #{tpu_custom_call.1} parent=31 // pred_region
          %p374 = scmp.lt.s32.totalorder %s23, 3
          %s375 = scalar_select %p374, %s23, 3
          %s376 = scalar_lea.vmem %s2, %s375
        $region44: #{tpu_custom_call.1} parent=31 // pred_fallthru
          _
        // Predicated region
        $region45: #{tpu_custom_call.1} parent=31 // pred_check
          %p377 = pneg %p121
        $region46: #{tpu_custom_call.1} parent=31 // pred_check_branch
          %379 = sbr.rel (%p377) target = $region48
        $region47: #{tpu_custom_call.1} parent=31 // pred_region
          %p380 = scmp.lt.s32.totalorder %s23, 3
          %s381 = scalar_select %p380, %s23, 3
          %s382 = scalar_lea.vmem %s3, %s381
        $region48: #{tpu_custom_call.1} parent=31 // pred_fallthru
          _
      $region32: #{tpu_custom_call.1} parent=5 // pred_fallthru
        _
      %p383 = scmp.le.s32.totalorder 1, %s23
      %p384 = scmp.lt.s32.totalorder %s23, 5
      %p385 = pnand %p383, %p384
      %p386 = pneg %p385
      // Predicated region
      $region49: #{tpu_custom_call.1} parent=5 // pred_check
        _
      $region50: #{tpu_custom_call.1} parent=5 // pred_check_branch
        %388 = sbr.rel (%p385) target = $region52
      $region51: #{tpu_custom_call.1} parent=5 // pred_region
        %s389 = ssub.s32 %s23, 1
        %s390 = sand.u32 %s36, 1
        %s391 = scalar_lea.sflag [#allocation3], %s390
        %s392 = sand.u32 %s36, 1
        %s393 = smul.addr %s392, 32
        %s394 = scalar_lea.vmem [#allocation2], %s393
        // Predicated region
        $region53: #{tpu_custom_call.1} parent=51 // pred_check
          %p395 = pneg %p49
        $region54: #{tpu_custom_call.1} parent=51 // pred_check_branch
          %397 = sbr.rel (%p395) target = $region56
        $region55: #{tpu_custom_call.1} parent=51 // pred_region
          %399 = dma.done %s391, 512
        $region56: #{tpu_custom_call.1} parent=51 // pred_fallthru
          _
        %s400 = sand.u32 %s28, 1
        %s401 = scalar_lea.sflag [#allocation5], %s400
        %s402 = sand.u32 %s62, 1
        %s403 = smul.addr %s402, 32
        %s404 = scalar_lea.vmem [#allocation4], %s403
        // Predicated region
        $region57: #{tpu_custom_call.1} parent=51 // pred_check
          %p405 = pneg %p75
        $region58: #{tpu_custom_call.1} parent=51 // pred_check_branch
          %407 = sbr.rel (%p405) target = $region60
        $region59: #{tpu_custom_call.1} parent=51 // pred_region
          %409 = dma.done %s401, 512
        $region60: #{tpu_custom_call.1} parent=51 // pred_fallthru
          _
        // Predicated region
        $region61: #{tpu_custom_call.1} parent=51 // pred_check
          %p410 = pneg %p148
        $region62: #{tpu_custom_call.1} parent=51 // pred_check_branch
          %412 = sbr.rel (%p410) target = $region64
        $region63: #{tpu_custom_call.1} parent=51 // pred_region
          %414 = dma.done [#allocation5], 8192
        $region64: #{tpu_custom_call.1} parent=51 // pred_fallthru
          _
        // Predicated region
        $region65: #{tpu_custom_call.1} parent=51 // pred_check
          %p415 = pneg %p169
        $region66: #{tpu_custom_call.1} parent=51 // pred_check_branch
          %417 = sbr.rel (%p415) target = $region68
        $region67: #{tpu_custom_call.1} parent=51 // pred_region
          %419 = dma.done [#allocation8], 4096
        $region68: #{tpu_custom_call.1} parent=51 // pred_fallthru
          _
        // Predicated region
        $region69: #{tpu_custom_call.1} parent=51 // pred_check
          %p420 = pneg %p190
        $region70: #{tpu_custom_call.1} parent=51 // pred_check_branch
          %422 = sbr.rel (%p420) target = $region72
        $region71: #{tpu_custom_call.1} parent=51 // pred_region
          %424 = dma.done [#allocation8], 4096
        $region72: #{tpu_custom_call.1} parent=51 // pred_fallthru
          _
        %s425 = sand.u32 %s36, 1
        %s426 = scalar_lea.sflag [#allocation3], %s425
        %s427 = sand.u32 %s36, 1
        %s428 = smul.addr %s427, 32
        %s429 = scalar_lea.vmem [#allocation2], %s428
        %p430 = pneg %p49
        %p431 = pneg %p46
        %s432 = sand.u32 %s28, 1
        %s433 = scalar_lea.sflag [#allocation5], %s432
        %s434 = sand.u32 %s62, 1
        %s435 = smul.addr %s434, 32
        %s436 = scalar_lea.vmem [#allocation4], %s435
        %p437 = pneg %p75
        %p438 = pneg %p72
        %p439 = scmp.lt.s32.totalorder %s28, 3
        %s440 = scalar_select %p439, %s28, 3
        %s441 = scalar_lea.vmem %s2, %s440
        %p442 = pneg %p101
        %p443 = pneg %p98
        %p444 = scmp.lt.s32.totalorder %s28, 3
        %s445 = scalar_select %p444, %s28, 3
        %s446 = scalar_lea.vmem %s3, %s445
        %p447 = pneg %p127
        %p448 = pneg %p124
        %p449 = pneg %p148
        %p450 = pneg %p145
        %p451 = pneg %p169
        %p452 = pneg %p166
        %p453 = pneg %p190
        %p454 = pneg %p187
        %p455 = pneg %p211
        %p456 = pneg %p208
        %p457 = pneg %p237
        %p458 = pneg %p234
        %p459 = scmp.lt.s32.totalorder %s28, 3
        %s460 = scalar_select %p459, %s28, 3
        %s461 = smul.addr %s460, 3
        %s462 = smul.addr %s461, 8
        %s463 = scalar_lea.vmem %s8, %s462
        %p464 = pneg %p263
        %p465 = pneg %p260
        %p466 = scmp.lt.s32.totalorder %s28, 3
        %s467 = scalar_select %p466, %s28, 3
        %s468 = smul.addr %s467, 3
        %s469 = smul.addr %s468, 8
        %s470 = scalar_lea.vmem %s9, %s469
        %p471 = scmp.lt.s32.totalorder %s28, 3
        %s472 = scalar_select %p471, %s28, 3
        %s473 = scalar_lea.vmem %s2, %s472
        %p474 = scmp.lt.s32.totalorder %s28, 3
        %s475 = scalar_select %p474, %s28, 3
        %s476 = scalar_lea.vmem %s3, %s475
        %p477 = scmp.lt.s32.totalorder %s28, 3
        %s478 = scalar_select %p477, %s28, 3
        %s479 = smul.addr %s478, 3
        %s480 = smul.addr %s479, 8
        %s481 = scalar_lea.vmem %s8, %s480
        %p482 = scmp.lt.s32.totalorder %s28, 3
        %s483 = scalar_select %p482, %s28, 3
        %s484 = smul.addr %s483, 3
        %s485 = smul.addr %s484, 8
        %s486 = scalar_lea.vmem %s9, %s485
        %v487 = vld [vmem:[%s394] sm:$0xff]
        %v488 = vld [vmem:[%s394 + $0x8] sm:$0xff]
        %v489 = vld [vmem:[%s394 + $0x10] sm:$0xff]
        %v490 = vld [vmem:[%s394 + $0x18] sm:$0xff]
        %v491 = vld [vmem:[#allocation6] sm:$0xff]
        %v492 = vld [vmem:[#allocation6 + $0x8] sm:$0xff]
        %v493 = vld [vmem:[#allocation6 + $0x10] sm:$0xff]
        %v494 = vld [vmem:[#allocation6 + $0x18] sm:$0xff]
        %v495 = vld [vmem:[#allocation6 + $0x20] sm:$0xff]
        %v496 = vld [vmem:[#allocation6 + $0x28] sm:$0xff]
        %v497 = vld [vmem:[#allocation6 + $0x30] sm:$0xff]
        %v498 = vld [vmem:[#allocation6 + $0x38] sm:$0xff]
        %v499 = vld [vmem:[#allocation6 + $0x40] sm:$0xff]
        %v500 = vld [vmem:[#allocation6 + $0x48] sm:$0xff]
        %v501 = vld [vmem:[#allocation6 + $0x50] sm:$0xff]
        %v502 = vld [vmem:[#allocation6 + $0x58] sm:$0xff]
        %v503 = vld [vmem:[#allocation6 + $0x60] sm:$0xff]
        %v504 = vld [vmem:[#allocation6 + $0x68] sm:$0xff]
        %v505 = vld [vmem:[#allocation6 + $0x70] sm:$0xff]
        %v506 = vld [vmem:[#allocation6 + $0x78] sm:$0xff]
        %v507 = vld [vmem:[#allocation6 + $0x80] sm:$0xff]
        %v508 = vld [vmem:[#allocation6 + $0x88] sm:$0xff]
        %v509 = vld [vmem:[#allocation6 + $0x90] sm:$0xff]
        %v510 = vld [vmem:[#allocation6 + $0x98] sm:$0xff]
        %v511 = vld [vmem:[#allocation6 + $0xa0] sm:$0xff]
        %v512 = vld [vmem:[#allocation6 + $0xa8] sm:$0xff]
        %v513 = vld [vmem:[#allocation6 + $0xb0] sm:$0xff]
        %v514 = vld [vmem:[#allocation6 + $0xb8] sm:$0xff]
        %v515 = vld [vmem:[#allocation6 + $0xc0] sm:$0xff]
        %v516 = vld [vmem:[#allocation6 + $0xc8] sm:$0xff]
        %v517 = vld [vmem:[#allocation6 + $0xd0] sm:$0xff]
        %v518 = vld [vmem:[#allocation6 + $0xd8] sm:$0xff]
        %v519 = vld [vmem:[#allocation6 + $0xe0] sm:$0xff]
        %v520 = vld [vmem:[#allocation6 + $0xe8] sm:$0xff]
        %v521 = vld [vmem:[#allocation6 + $0xf0] sm:$0xff]
        %v522 = vld [vmem:[#allocation6 + $0xf8] sm:$0xff]
        %v523 = vpack.c.bf16 %v492, %v491
        %v524 = vpack.c.bf16 %v494, %v493
        %v525 = vpack.c.bf16 %v496, %v495
        %v526 = vpack.c.bf16 %v498, %v497
        %v527 = vpack.c.bf16 %v500, %v499
        %v528 = vpack.c.bf16 %v502, %v501
        %v529 = vpack.c.bf16 %v504, %v503
        %v530 = vpack.c.bf16 %v506, %v505
        %v531 = vpack.c.bf16 %v508, %v507
        %v532 = vpack.c.bf16 %v510, %v509
        %v533 = vpack.c.bf16 %v512, %v511
        %v534 = vpack.c.bf16 %v514, %v513
        %v535 = vpack.c.bf16 %v516, %v515
        %v536 = vpack.c.bf16 %v518, %v517
        %v537 = vpack.c.bf16 %v520, %v519
        %v538 = vpack.c.bf16 %v522, %v521
        %v539 = vld [vmem:[#allocation7] sm:$0xff]
        %v540 = vld [vmem:[#allocation7 + $0x8] sm:$0xff]
        %v541 = vld [vmem:[#allocation7 + $0x10] sm:$0xff]
        %v542 = vld [vmem:[#allocation7 + $0x18] sm:$0xff]
        %v543 = vld [vmem:[#allocation7 + $0x20] sm:$0xff]
        %v544 = vld [vmem:[#allocation7 + $0x28] sm:$0xff]
        %v545 = vld [vmem:[#allocation7 + $0x30] sm:$0xff]
        %v546 = vld [vmem:[#allocation7 + $0x38] sm:$0xff]
        %v547 = vld [vmem:[#allocation7 + $0x40] sm:$0xff]
        %v548 = vld [vmem:[#allocation7 + $0x48] sm:$0xff]
        %v549 = vld [vmem:[#allocation7 + $0x50] sm:$0xff]
        %v550 = vld [vmem:[#allocation7 + $0x58] sm:$0xff]
        %v551 = vld [vmem:[#allocation7 + $0x60] sm:$0xff]
        %v552 = vld [vmem:[#allocation7 + $0x68] sm:$0xff]
        %v553 = vld [vmem:[#allocation7 + $0x70] sm:$0xff]
        %v554 = vld [vmem:[#allocation7 + $0x78] sm:$0xff]
        %v555 = vpack.c.bf16 %v540, %v539
        %v556 = vpack.c.bf16 %v542, %v541
        %v557 = vpack.c.bf16 %v544, %v543
        %v558 = vpack.c.bf16 %v546, %v545
        %v559 = vpack.c.bf16 %v548, %v547
        %v560 = vpack.c.bf16 %v550, %v549
        %v561 = vpack.c.bf16 %v552, %v551
        %v562 = vpack.c.bf16 %v554, %v553
        %v563 = vld [vmem:[#allocation9] sm:$0xff]
        %v564 = vld [vmem:[#allocation9 + $0x8] sm:$0xff]
        %v565 = vld [vmem:[#allocation9 + $0x10] sm:$0xff]
        %v566 = vld [vmem:[#allocation9 + $0x18] sm:$0xff]
        %v567 = vld [vmem:[#allocation9 + $0x20] sm:$0xff]
        %v568 = vld [vmem:[#allocation9 + $0x28] sm:$0xff]
        %v569 = vld [vmem:[#allocation9 + $0x30] sm:$0xff]
        %v570 = vld [vmem:[#allocation9 + $0x38] sm:$0xff]
        %v571 = vld [vmem:[#allocation9 + $0x40] sm:$0xff]
        %v572 = vld [vmem:[#allocation9 + $0x48] sm:$0xff]
        %v573 = vld [vmem:[#allocation9 + $0x50] sm:$0xff]
        %v574 = vld [vmem:[#allocation9 + $0x58] sm:$0xff]
        %v575 = vld [vmem:[#allocation9 + $0x60] sm:$0xff]
        %v576 = vld [vmem:[#allocation9 + $0x68] sm:$0xff]
        %v577 = vld [vmem:[#allocation9 + $0x70] sm:$0xff]
        %v578 = vld [vmem:[#allocation9 + $0x78] sm:$0xff]
        %v579 = vpack.c.bf16 %v564, %v563
        %v580 = vpack.c.bf16 %v566, %v565
        %v581 = vpack.c.bf16 %v568, %v567
        %v582 = vpack.c.bf16 %v570, %v569
        %v583 = vpack.c.bf16 %v572, %v571
        %v584 = vpack.c.bf16 %v574, %v573
        %v585 = vpack.c.bf16 %v576, %v575
        %v586 = vpack.c.bf16 %v578, %v577
        %v587 = vld [vmem:[%s7] sm:$0x7]
        %v588 = vpack.c.bf16 %v489, %v487
        %v589 = vpack.c.bf16 %v490, %v488
        %v590 = vperm.slane %v587, 0
        %591 = vmatpush.bf16.msra.mxu0 %v530
        %592 = vmatpush.bf16.msra.mxu0 %v529
        %593 = vmatpush.bf16.msra.mxu0 %v528
        %594 = vmatpush.bf16.msra.mxu0 %v527
        %595 = vmatpush.bf16.msra.mxu0 %v526
        %596 = vmatpush.bf16.msra.mxu0 %v525
        %597 = vmatpush.bf16.msra.mxu0 %v524
        %598 = vmatpush.bf16.msra.mxu0 %v523
        %599 = vmatmul.bf16.gmra.mxu0 %v588
        %v600 = vpop.f32.mrf.mxu0
        %v601 = vadd.f32 %v590, %v600
        %v602 = vpop.f32.mrf.mxu0
        %v603 = vadd.f32 %v590, %v602
        %604 = vdwg.mxu0
        %605 = vmatpush.bf16.msra.mxu0 %v538
        %606 = vmatpush.bf16.msra.mxu0 %v537
        %607 = vmatpush.bf16.msra.mxu0 %v536
        %608 = vmatpush.bf16.msra.mxu0 %v535
        %609 = vmatpush.bf16.msra.mxu0 %v534
        %610 = vmatpush.bf16.msra.mxu0 %v533
        %611 = vmatpush.bf16.msra.mxu0 %v532
        %612 = vmatpush.bf16.msra.mxu0 %v531
        %613 = vmatmul.bf16.gmra.mxu0 %v589
        %v614 = vpop.f32.mrf.mxu0
        %v615 = vadd.f32 %v601, %v614
        %v616 = vpop.f32.mrf.mxu0
        %v617 = vadd.f32 %v603, %v616
        %618 = vdwg.mxu0
        %v619 = vmax.f32 %v615, 0.0
        %v620 = vmax.f32 %v617, 0.0
        %v621 = vpack.c.bf16 %v620, %v619
        %v622 = vperm.slane %v587, 1
        %623 = vmatpush.bf16.msra.mxu0 %v562
        %624 = vmatpush.bf16.msra.mxu0 %v561
        %625 = vmatpush.bf16.msra.mxu0 %v560
        %626 = vmatpush.bf16.msra.mxu0 %v559
        %627 = vmatpush.bf16.msra.mxu0 %v558
        %628 = vmatpush.bf16.msra.mxu0 %v557
        %629 = vmatpush.bf16.msra.mxu0 %v556
        %630 = vmatpush.bf16.msra.mxu0 %v555
        %631 = vmatmul.bf16.gmra.mxu0 %v621
        %v632 = vpop.f32.mrf.mxu0
        %v633 = vadd.f32 %v622, %v632
        %v634 = vpop.f32.mrf.mxu0
        %v635 = vadd.f32 %v622, %v634
        %636 = vdwg.mxu0
        %v637 = vmax.f32 %v633, 0.0
        %v638 = vmax.f32 %v635, 0.0
        %v639 = vpack.c.bf16 %v638, %v637
        %v640 = vperm.slane %v587, 2
        %641 = vmatpush.bf16.msra.mxu0 %v586
        %642 = vmatpush.bf16.msra.mxu0 %v585
        %643 = vmatpush.bf16.msra.mxu0 %v584
        %644 = vmatpush.bf16.msra.mxu0 %v583
        %645 = vmatpush.bf16.msra.mxu0 %v582
        %646 = vmatpush.bf16.msra.mxu0 %v581
        %647 = vmatpush.bf16.msra.mxu0 %v580
        %648 = vmatpush.bf16.msra.mxu0 %v579
        %649 = vmatmul.bf16.gmra.mxu0 %v639
        %v650 = vpop.f32.mrf.mxu0
        %v651 = vadd.f32 %v640, %v650
        %v652 = vpop.f32.mrf.mxu0
        %v653 = vadd.f32 %v640, %v652
        %654 = vdwg.mxu0
        %655 = vst [vmem:[%s481] sm:$0xff] %v651
        %656 = vst [vmem:[%s481 + $0x8] sm:$0xff] %v653
        %v657 = vld [vmem:[%s473] sm:$0x1]
        %658 = vst [vmem:[%s481 + $0x10] sm:$0x1] %v657
        %v659 = vld [vmem:[%s404] sm:$0xff]
        %v660 = vld [vmem:[%s404 + $0x8] sm:$0xff]
        %v661 = vld [vmem:[%s404 + $0x10] sm:$0xff]
        %v662 = vld [vmem:[%s404 + $0x18] sm:$0xff]
        %s663 = scalar_lea.vmem [#allocation6], 256
        %v664 = vld [vmem:[%s663] sm:$0xff]
        %v665 = vld [vmem:[%s663 + $0x8] sm:$0xff]
        %v666 = vld [vmem:[%s663 + $0x10] sm:$0xff]
        %v667 = vld [vmem:[%s663 + $0x18] sm:$0xff]
        %v668 = vld [vmem:[%s663 + $0x20] sm:$0xff]
        %v669 = vld [vmem:[%s663 + $0x28] sm:$0xff]
        %v670 = vld [vmem:[%s663 + $0x30] sm:$0xff]
        %v671 = vld [vmem:[%s663 + $0x38] sm:$0xff]
        %v672 = vld [vmem:[%s663 + $0x40] sm:$0xff]
        %v673 = vld [vmem:[%s663 + $0x48] sm:$0xff]
        %v674 = vld [vmem:[%s663 + $0x50] sm:$0xff]
        %v675 = vld [vmem:[%s663 + $0x58] sm:$0xff]
        %v676 = vld [vmem:[%s663 + $0x60] sm:$0xff]
        %v677 = vld [vmem:[%s663 + $0x68] sm:$0xff]
        %v678 = vld [vmem:[%s663 + $0x70] sm:$0xff]
        %v679 = vld [vmem:[%s663 + $0x78] sm:$0xff]
        %v680 = vld [vmem:[%s663 + $0x80] sm:$0xff]
        %v681 = vld [vmem:[%s663 + $0x88] sm:$0xff]
        %v682 = vld [vmem:[%s663 + $0x90] sm:$0xff]
        %v683 = vld [vmem:[%s663 + $0x98] sm:$0xff]
        %v684 = vld [vmem:[%s663 + $0xa0] sm:$0xff]
        %v685 = vld [vmem:[%s663 + $0xa8] sm:$0xff]
        %v686 = vld [vmem:[%s663 + $0xb0] sm:$0xff]
        %v687 = vld [vmem:[%s663 + $0xb8] sm:$0xff]
        %v688 = vld [vmem:[%s663 + $0xc0] sm:$0xff]
        %v689 = vld [vmem:[%s663 + $0xc8] sm:$0xff]
        %v690 = vld [vmem:[%s663 + $0xd0] sm:$0xff]
        %v691 = vld [vmem:[%s663 + $0xd8] sm:$0xff]
        %v692 = vld [vmem:[%s663 + $0xe0] sm:$0xff]
        %v693 = vld [vmem:[%s663 + $0xe8] sm:$0xff]
        %v694 = vld [vmem:[%s663 + $0xf0] sm:$0xff]
        %v695 = vld [vmem:[%s663 + $0xf8] sm:$0xff]
        %v696 = vpack.c.bf16 %v665, %v664
        %v697 = vpack.c.bf16 %v667, %v666
        %v698 = vpack.c.bf16 %v669, %v668
        %v699 = vpack.c.bf16 %v671, %v670
        %v700 = vpack.c.bf16 %v673, %v672
        %v701 = vpack.c.bf16 %v675, %v674
        %v702 = vpack.c.bf16 %v677, %v676
        %v703 = vpack.c.bf16 %v679, %v678
        %v704 = vpack.c.bf16 %v681, %v680
        %v705 = vpack.c.bf16 %v683, %v682
        %v706 = vpack.c.bf16 %v685, %v684
        %v707 = vpack.c.bf16 %v687, %v686
        %v708 = vpack.c.bf16 %v689, %v688
        %v709 = vpack.c.bf16 %v691, %v690
        %v710 = vpack.c.bf16 %v693, %v692
        %v711 = vpack.c.bf16 %v695, %v694
        %s712 = scalar_lea.vmem [#allocation7], 128
        %v713 = vld [vmem:[%s712] sm:$0xff]
        %v714 = vld [vmem:[%s712 + $0x8] sm:$0xff]
        %v715 = vld [vmem:[%s712 + $0x10] sm:$0xff]
        %v716 = vld [vmem:[%s712 + $0x18] sm:$0xff]
        %v717 = vld [vmem:[%s712 + $0x20] sm:$0xff]
        %v718 = vld [vmem:[%s712 + $0x28] sm:$0xff]
        %v719 = vld [vmem:[%s712 + $0x30] sm:$0xff]
        %v720 = vld [vmem:[%s712 + $0x38] sm:$0xff]
        %v721 = vld [vmem:[%s712 + $0x40] sm:$0xff]
        %v722 = vld [vmem:[%s712 + $0x48] sm:$0xff]
        %v723 = vld [vmem:[%s712 + $0x50] sm:$0xff]
        %v724 = vld [vmem:[%s712 + $0x58] sm:$0xff]
        %v725 = vld [vmem:[%s712 + $0x60] sm:$0xff]
        %v726 = vld [vmem:[%s712 + $0x68] sm:$0xff]
        %v727 = vld [vmem:[%s712 + $0x70] sm:$0xff]
        %v728 = vld [vmem:[%s712 + $0x78] sm:$0xff]
        %v729 = vpack.c.bf16 %v714, %v713
        %v730 = vpack.c.bf16 %v716, %v715
        %v731 = vpack.c.bf16 %v718, %v717
        %v732 = vpack.c.bf16 %v720, %v719
        %v733 = vpack.c.bf16 %v722, %v721
        %v734 = vpack.c.bf16 %v724, %v723
        %v735 = vpack.c.bf16 %v726, %v725
        %v736 = vpack.c.bf16 %v728, %v727
        %s737 = scalar_lea.vmem [#allocation9], 128
        %v738 = vld [vmem:[%s737] sm:$0xff]
        %v739 = vld [vmem:[%s737 + $0x8] sm:$0xff]
        %v740 = vld [vmem:[%s737 + $0x10] sm:$0xff]
        %v741 = vld [vmem:[%s737 + $0x18] sm:$0xff]
        %v742 = vld [vmem:[%s737 + $0x20] sm:$0xff]
        %v743 = vld [vmem:[%s737 + $0x28] sm:$0xff]
        %v744 = vld [vmem:[%s737 + $0x30] sm:$0xff]
        %v745 = vld [vmem:[%s737 + $0x38] sm:$0xff]
        %v746 = vld [vmem:[%s737 + $0x40] sm:$0xff]
        %v747 = vld [vmem:[%s737 + $0x48] sm:$0xff]
        %v748 = vld [vmem:[%s737 + $0x50] sm:$0xff]
        %v749 = vld [vmem:[%s737 + $0x58] sm:$0xff]
        %v750 = vld [vmem:[%s737 + $0x60] sm:$0xff]
        %v751 = vld [vmem:[%s737 + $0x68] sm:$0xff]
        %v752 = vld [vmem:[%s737 + $0x70] sm:$0xff]
        %v753 = vld [vmem:[%s737 + $0x78] sm:$0xff]
        %v754 = vpack.c.bf16 %v739, %v738
        %v755 = vpack.c.bf16 %v741, %v740
        %v756 = vpack.c.bf16 %v743, %v742
        %v757 = vpack.c.bf16 %v745, %v744
        %v758 = vpack.c.bf16 %v747, %v746
        %v759 = vpack.c.bf16 %v749, %v748
        %v760 = vpack.c.bf16 %v751, %v750
        %v761 = vpack.c.bf16 %v753, %v752
        %s762 = scalar_lea.vmem %s7, 4
        %v763 = vld [vmem:[%s762] sm:$0x7]
        %v764 = vpack.c.bf16 %v661, %v659
        %v765 = vpack.c.bf16 %v662, %v660
        %v766 = vperm.slane %v763, 0
        %767 = vmatpush.bf16.msra.mxu0 %v703
        %768 = vmatpush.bf16.msra.mxu0 %v702
        %769 = vmatpush.bf16.msra.mxu0 %v701
        %770 = vmatpush.bf16.msra.mxu0 %v700
        %771 = vmatpush.bf16.msra.mxu0 %v699
        %772 = vmatpush.bf16.msra.mxu0 %v698
        %773 = vmatpush.bf16.msra.mxu0 %v697
        %774 = vmatpush.bf16.msra.mxu0 %v696
        %775 = vmatmul.bf16.gmra.mxu0 %v764
        %v776 = vpop.f32.mrf.mxu0
        %v777 = vadd.f32 %v766, %v776
        %v778 = vpop.f32.mrf.mxu0
        %v779 = vadd.f32 %v766, %v778
        %780 = vdwg.mxu0
        %781 = vmatpush.bf16.msra.mxu0 %v711
        %782 = vmatpush.bf16.msra.mxu0 %v710
        %783 = vmatpush.bf16.msra.mxu0 %v709
        %784 = vmatpush.bf16.msra.mxu0 %v708
        %785 = vmatpush.bf16.msra.mxu0 %v707
        %786 = vmatpush.bf16.msra.mxu0 %v706
        %787 = vmatpush.bf16.msra.mxu0 %v705
        %788 = vmatpush.bf16.msra.mxu0 %v704
        %789 = vmatmul.bf16.gmra.mxu0 %v765
        %v790 = vpop.f32.mrf.mxu0
        %v791 = vadd.f32 %v777, %v790
        %v792 = vpop.f32.mrf.mxu0
        %v793 = vadd.f32 %v779, %v792
        %794 = vdwg.mxu0
        %v795 = vmax.f32 %v791, 0.0
        %v796 = vmax.f32 %v793, 0.0
        %v797 = vpack.c.bf16 %v796, %v795
        %v798 = vperm.slane %v763, 1
        %799 = vmatpush.bf16.msra.mxu0 %v736
        %800 = vmatpush.bf16.msra.mxu0 %v735
        %801 = vmatpush.bf16.msra.mxu0 %v734
        %802 = vmatpush.bf16.msra.mxu0 %v733
        %803 = vmatpush.bf16.msra.mxu0 %v732
        %804 = vmatpush.bf16.msra.mxu0 %v731
        %805 = vmatpush.bf16.msra.mxu0 %v730
        %806 = vmatpush.bf16.msra.mxu0 %v729
        %807 = vmatmul.bf16.gmra.mxu0 %v797
        %v808 = vpop.f32.mrf.mxu0
        %v809 = vadd.f32 %v798, %v808
        %v810 = vpop.f32.mrf.mxu0
        %v811 = vadd.f32 %v798, %v810
        %812 = vdwg.mxu0
        %v813 = vmax.f32 %v809, 0.0
        %v814 = vmax.f32 %v811, 0.0
        %v815 = vpack.c.bf16 %v814, %v813
        %v816 = vperm.slane %v763, 2
        %817 = vmatpush.bf16.msra.mxu0 %v761
        %818 = vmatpush.bf16.msra.mxu0 %v760
        %819 = vmatpush.bf16.msra.mxu0 %v759
        %820 = vmatpush.bf16.msra.mxu0 %v758
        %821 = vmatpush.bf16.msra.mxu0 %v757
        %822 = vmatpush.bf16.msra.mxu0 %v756
        %823 = vmatpush.bf16.msra.mxu0 %v755
        %824 = vmatpush.bf16.msra.mxu0 %v754
        %825 = vmatmul.bf16.gmra.mxu0 %v815
        %v826 = vpop.f32.mrf.mxu0
        %v827 = vadd.f32 %v816, %v826
        %v828 = vpop.f32.mrf.mxu0
        %v829 = vadd.f32 %v816, %v828
        %830 = vdwg.mxu0
        %831 = vst [vmem:[%s486] sm:$0xff] %v827
        %832 = vst [vmem:[%s486 + $0x8] sm:$0xff] %v829
        %v833 = vld [vmem:[%s476] sm:$0x1]
        %834 = vst [vmem:[%s486 + $0x10] sm:$0x1] %v833
        %p835 = scmp.lt.s32.totalorder %s28, 3
        %s836 = scalar_select %p835, %s28, 3
        %s837 = smul.addr %s836, 3
        %s838 = smul.addr %s837, 8
        %s839 = scalar_lea.vmem %s8, %s838
        %p840 = scmp.lt.s32.totalorder %s28, 3
        %s841 = scalar_select %p840, %s28, 3
        %s842 = smul.addr %s841, 3
        %s843 = smul.addr %s842, 8
        %s844 = scalar_lea.vmem %s9, %s843
        // Predicated region
        $region73: #{tpu_custom_call.1} parent=51 // pred_check
          %p845 = pneg %p234
        $region74: #{tpu_custom_call.1} parent=51 // pred_check_branch
          %847 = sbr.rel (%p845) target = $region76
        $region75: #{tpu_custom_call.1} parent=51 // pred_region
          _
        $region76: #{tpu_custom_call.1} parent=51 // pred_fallthru
          _
        // Predicated region
        $region77: #{tpu_custom_call.1} parent=51 // pred_check
          %p848 = pneg %p260
        $region78: #{tpu_custom_call.1} parent=51 // pred_check_branch
          %850 = sbr.rel (%p848) target = $region80
        $region79: #{tpu_custom_call.1} parent=51 // pred_region
          _
        $region80: #{tpu_custom_call.1} parent=51 // pred_fallthru
          _
      $region52: #{tpu_custom_call.1} parent=5 // pred_fallthru
        _
      %p851 = scmp.le.s32.totalorder 2, %s23
      // Predicated region
      $region81: #{tpu_custom_call.1} parent=5 // pred_check
        %p852 = pneg %p851
      $region82: #{tpu_custom_call.1} parent=5 // pred_check_branch
        %854 = sbr.rel (%p852) target = $region84
      $region83: #{tpu_custom_call.1} parent=5 // pred_region
        %s855 = ssub.s32 %s23, 2
        // Predicated region
        $region85: #{tpu_custom_call.1} parent=83 // pred_check
          %p856 = pneg %p240
        $region86: #{tpu_custom_call.1} parent=83 // pred_check_branch
          %858 = sbr.rel (%p856) target = $region88
        $region87: #{tpu_custom_call.1} parent=83 // pred_region
          %p859 = scmp.lt.s32.totalorder %s29, 3
          %s860 = scalar_select %p859, %s29, 3
          %s861 = smul.addr %s860, 3
          %s862 = smul.addr %s861, 8
          %s863 = scalar_lea.vmem %s8, %s862
        $region88: #{tpu_custom_call.1} parent=83 // pred_fallthru
          _
        // Predicated region
        $region89: #{tpu_custom_call.1} parent=83 // pred_check
          %p864 = pneg %p266
        $region90: #{tpu_custom_call.1} parent=83 // pred_check_branch
          %866 = sbr.rel (%p864) target = $region92
        $region91: #{tpu_custom_call.1} parent=83 // pred_region
          %p867 = scmp.lt.s32.totalorder %s29, 3
          %s868 = scalar_select %p867, %s29, 3
          %s869 = smul.addr %s868, 3
          %s870 = smul.addr %s869, 8
          %s871 = scalar_lea.vmem %s9, %s870
        $region92: #{tpu_custom_call.1} parent=83 // pred_fallthru
          _
      $region84: #{tpu_custom_call.1} parent=5 // pred_fallthru
        _
    $region6: #{tpu_custom_call.1} parent=1 // loop_footer
      %s27 = sadd.s32 1, %s23
    $region7: #{tpu_custom_call.1} parent=1 // loop_footer_branch
      %22 = sbr.rel target = $region3
    $region8: #{tpu_custom_call.1} parent=1 // loop_exit
      _
    %872 = vsyncpa [#allocation3], 1
    %s873 = scalar_lea.sflag [#allocation3], 1
    %874 = vsyncpa %s873, 1
    %875 = vsyncpa [#allocation5], 1
    %s876 = scalar_lea.sflag [#allocation5], 1
    %877 = vsyncpa %s876, 1
    %878 = vsyncpa [#allocation8], 1

</llo_original>
